<compile_context>
chip_gen: v7x
topology: tpu7x:2x2x1
jax: 0.10.0
libtpu: 0.0.40
codegen_flags: <defaults>
</compile_context>

<pallas_src>
import jax
import jax.numpy as jnp
from jax.experimental import pallas as pl
from jax.experimental.pallas import tpu as pltpu


def residual_block_kernel(x_ref, w_ref, b_ref, o_ref):
    # x_ref: (1, C, TN)   w_ref: (C, C)   b_ref: (C, 1)   o_ref: (1, C, TN)
    x = x_ref[0]                                            # (C, TN)
    y = jnp.dot(w_ref[...], x, preferred_element_type=jnp.float32)   # (C, TN) on MXU
    o_ref[0] = (y + b_ref[...] + x.astype(jnp.float32)).astype(o_ref.dtype)


def residual_forward(x_nchw, weight, bias, *, max_tile_n=8192):
    """x_nchw: [N, C, H, W]; weight: [C_out, C_in] (1x1 conv kernel squeezed); bias: [C_out]."""
    N, C, H, W = x_nchw.shape
    HW = H * W
    x_flat = x_nchw.reshape(N, C, HW)       # free reshape of NCHW (no data movement)
    b2d = bias.reshape(C, 1)                # column bias, broadcasts over the lane axis

    # Lane-dense tile along H*W: either the full extent, or a big multiple of 128.
    if HW <= max_tile_n:
        tile_n = HW                          # block == full dim, satisfies (8,128) rule
    else:
        tile_n = max_tile_n                  # multiple of 128; tail handled by masked writes

    n_tiles = pl.cdiv(HW, tile_n)
    grid = (N, n_tiles)

    x_spec = pl.BlockSpec((1, C, tile_n), lambda n, j: (n, 0, j))
    if N * n_tiles >= 4:
        # Deeper buffering only pays off (and is safe) when the pipeline is long enough.
        x_spec = pl.BlockSpec((1, C, tile_n), lambda n, j: (n, 0, j),
                              pipeline_mode=pl.Buffered(3))

    out_flat = pl.pallas_call(
        residual_block_kernel,
        out_shape=jax.ShapeDtypeStruct((N, C, HW), x_flat.dtype),
        grid_spec=pltpu.PrefetchScalarGridSpec(
            num_scalar_prefetch=0,
            grid=grid,
            in_specs=[
                x_spec,                                          # x tile (1, C, tile_n)
                pl.BlockSpec((C, C), lambda n, j: (0, 0)),       # weight (resident)
                pl.BlockSpec((C, 1), lambda n, j: (0, 0)),       # bias   (resident)
            ],
            out_specs=pl.BlockSpec((1, C, tile_n), lambda n, j: (n, 0, j)),
        ),
        compiler_params=pltpu.CompilerParams(
            dimension_semantics=("parallel", "parallel"),        # megacore sharding on v7x
        ),
    )(x_flat, weight, b2d)

    return out_flat.reshape(N, C, H, W)


if __name__ == "__main__":
    # Deterministic parameters + input (synthetic; no checkpoint load).
    key = jax.random.PRNGKey(0)
    k_x, k_w, k_b = jax.random.split(key, 3)

    N, C, H, Wd = 2, 32, 16, 16
    x = jax.random.normal(k_x, (N, C, H, Wd), dtype=jnp.float32)
    # Conv2d(C, C, kernel_size=1) weight has shape (C, C, 1, 1); store squeezed (C_out, C_in).
    weight = jax.random.normal(k_w, (C, C), dtype=jnp.float32) * (1.0 / jnp.sqrt(C))
    bias = jax.random.normal(k_b, (C,), dtype=jnp.float32) * 0.01

    out = residual_forward(x, weight, bias)
    out = jax.block_until_ready(out)

    # Pure-JAX reference: block(x) + x with block = 1x1 conv.
    ref = jnp.einsum("nchw,oc->nohw", x, weight) + bias[None, :, None, None] + x
    assert out.shape == x.shape and out.dtype == x.dtype
    assert jnp.allclose(out, ref, atol=1e-4, rtol=1e-4), "mismatch vs reference"

    print("KERNEL_OK")
</pallas_src>

<mosaic_0001>
module attributes {stable_mosaic.version = 11 : i64} {
  func.func @residual_block_kernel(%arg0: i32, %arg1: i32, %arg2: memref<1x32x256xf32, #tpu.memory_space<vmem>>, %arg3: memref<32x32xf32, #tpu.memory_space<vmem>>, %arg4: memref<32x1xf32, #tpu.memory_space<vmem>>, %arg5: memref<1x32x256xf32, #tpu.memory_space<vmem>>) attributes {dimension_semantics = [#tpu.dimension_semantics<parallel>, #tpu.dimension_semantics<parallel>], iteration_bounds = array<i64: 2, 1>, scalar_prefetch = 0 : i64, scratch_operands = 0 : i64, tpu.core_type = #tpu.core_type<tc>, window_params = [{transform_indices = @transform_0, window_bounds = array<i64: 1, 32, 256>}, {pipeline_mode = #tpu.pipeline_mode<synchronous>, transform_indices = @transform_1, window_bounds = array<i64: 32, 32>}, {pipeline_mode = #tpu.pipeline_mode<synchronous>, transform_indices = @transform_2, window_bounds = array<i64: 32, 1>}, {transform_indices = @transform_3, window_bounds = array<i64: 1, 32, 256>}]} {
    %c0 = arith.constant 0 : index
    %c0_0 = arith.constant 0 : index
    %c0_1 = arith.constant 0 : index
    %0 = vector.load %arg2[%c0, %c0_0, %c0_1] : memref<1x32x256xf32, #tpu.memory_space<vmem>>, vector<1x32x256xf32>
    %1 = vector.shape_cast %0 : vector<1x32x256xf32> to vector<32x256xf32>
    %c0_2 = arith.constant 0 : index
    %c0_3 = arith.constant 0 : index
    %2 = vector.load %arg3[%c0_2, %c0_3] : memref<32x32xf32, #tpu.memory_space<vmem>>, vector<32x32xf32>
    %cst = arith.constant dense<0.000000e+00> : vector<32x256xf32>
    %3 = tpu.matmul %2, %1, %cst {dimension_numbers = #tpu.dot_dimension_numbers<[1], [0], [0], [1], [0, 0, 1, 1], [], []>} : vector<32x32xf32>, vector<32x256xf32>, vector<32x256xf32> -> vector<32x256xf32>
    %c0_4 = arith.constant 0 : index
    %c0_5 = arith.constant 0 : index
    %4 = vector.load %arg4[%c0_4, %c0_5] : memref<32x1xf32, #tpu.memory_space<vmem>>, vector<32x1xf32>
    %5 = vector.broadcast %4 : vector<32x1xf32> to vector<32x256xf32>
    %6 = arith.addf %3, %5 : vector<32x256xf32>
    %7 = arith.addf %6, %1 : vector<32x256xf32>
    %c0_6 = arith.constant 0 : index
    %c0_7 = arith.constant 0 : index
    %c0_8 = arith.constant 0 : index
    %8 = vector.load %arg5[%c0_6, %c0_7, %c0_8] : memref<1x32x256xf32, #tpu.memory_space<vmem>>, vector<1x32x256xf32>
    %9 = vector.shape_cast %8 : vector<1x32x256xf32> to vector<32x256xf32>
    %10 = vector.shape_cast %7 : vector<32x256xf32> to vector<1x32x256xf32>
    tpu.vector_store %arg5[%c0_6, %c0_7, %c0_8], %10 {strides = array<i32>} : memref<1x32x256xf32, #tpu.memory_space<vmem>>, vector<1x32x256xf32>,
    return
  }
  func.func @transform_0(%arg0: i32, %arg1: i32) -> (i32, i32, i32) {
    %c0_i32 = arith.constant 0 : i32
    %c0_i32_0 = arith.constant 0 : i32
    return %arg0, %c0_i32, %arg1 : i32, i32, i32
  }
  func.func @transform_1(%arg0: i32, %arg1: i32) -> (i32, i32) {
    %c0_i32 = arith.constant 0 : i32
    %c0_i32_0 = arith.constant 0 : i32
    %c0_i32_1 = arith.constant 0 : i32
    return %c0_i32, %c0_i32_0 : i32, i32
  }
  func.func @transform_2(%arg0: i32, %arg1: i32) -> (i32, i32) {
    %c0_i32 = arith.constant 0 : i32
    %c0_i32_0 = arith.constant 0 : i32
    %c0_i32_1 = arith.constant 0 : i32
    return %c0_i32, %c0_i32_0 : i32, i32
  }
  func.func @transform_3(%arg0: i32, %arg1: i32) -> (i32, i32, i32) {
    %c0_i32 = arith.constant 0 : i32
    %c0_i32_0 = arith.constant 0 : i32
    return %arg0, %c0_i32, %arg1 : i32, i32, i32
  }
}

</mosaic_0001>

<llo_original>
// kernel: tpu_custom_call.1
$region0: #{tpu_custom_call.1}
  #allocation0 [shape = 'u32[]', space=smem, size = 0x4, offset = 0x4, fixed_abs, tag = 'smem constant byte address 0x4 - core index']
  #allocation1 [shape = 'u32[144,128]{1,0:T(1,128)}', space=vmem, size = 0x12000, scoped, tag = 'internal scratch']
  %s0 = inlined_call_operand.hbm [shape: f32[2,32,256], index: 0, kind: input, shape index: {}]
  %s1 = inlined_call_operand.vmem [shape: f32[32,32], index: 1, kind: input, shape index: {}]
  %s2 = inlined_call_operand.vmem [shape: f32[32,1], index: 2, kind: input, shape index: {}]
  %s3 = inlined_call_operand.hbm [shape: f32[2,32,256], index: 3, kind: output, shape index: {}]
  %s4 = sld [smem:[#allocation0]]
  $region49: #{tpu_custom_call.1} parent=0
    _
  %s6 = ssub.s32 1, %s4
  %s7 = scalar_select 0, %s6, %s4
  $region1: #{tpu_custom_call.1} parent=0
    #allocation2 [shape = 'u8[65536]{0}', space=vmem, size = 0x10000, scoped, tag = 'input window, operand 0']
    #allocation3 [shape = 's32[2]{0}', space=sflag, size = 0x8, scoped, tag = 'scoped memory for tpu_custom_call.1']
    #allocation4 [shape = 's32[2]{0}', space=sflag, size = 0x8, scoped, tag = 'scoped memory for tpu_custom_call.1']
    #allocation5 [shape = 'u8[65536]{0}', space=vmem, size = 0x10000, scoped, tag = 'output window, operand 0']
    %8 = vsyncpa [#allocation3], 0
    %s9 = scalar_lea.sflag [#allocation3], 1
    %10 = vsyncpa %s9, 0
    %11 = vsyncpa [#allocation4], 0
    %s12 = scalar_lea.sflag [#allocation4], 1
    %13 = vsyncpa %s12, 0
    loop: start=0, step=1, limit=4
    $region2: #{tpu_custom_call.1} parent=1 // loop_pre_header
      _
    $region3: #{tpu_custom_call.1} parent=1 // loop_header
      %s15 = sphi 0, %s19
      %p16 = scmp.ge.s32.totalorder %s15, 4
      %s22 = sphi 0, %s34
      %s23 = sphi 0, %s30
      %s24 = sphi 0, %s22
      %s25 = sphi 0, %s23
      %s26 = sphi 0, %s24
      %s27 = sphi 0, %s25
      %s39 = sphi 0, %s41
      %s42 = sphi 0, %s39
      %s43 = sphi 0, %s42
      %s59 = sphi 0, %s43
      %s63 = sphi 0, %s63
      %s65 = sphi 0, %s63
      %s66 = sphi 0, %s65
      %s80 = sphi 0, %s66
      %s84 = sphi 0, %s84
      %s86 = sphi 0, %s84
      %s87 = sphi 0, %s86
      %s101 = sphi 0, %s87
      %s109 = sphi 0, %s111
      %s112 = sphi 0, %s109
      %s113 = sphi 0, %s112
      %s129 = sphi 0, %s113
    $region4: #{tpu_custom_call.1} parent=1 // loop_header_branch
      %18 = sbr.rel (%p16) target = $region8
    $region5: #{tpu_custom_call.1} parent=1 // loop_body
      %s20 = ssub.s32 %s15, 1
      %s21 = ssub.s32 %s15, 2
      %s28 = sadd.s32 1, %s23
      %p29 = scmp.ge.s32.totalorder %s28, 1
      %s30 = scalar_select %p29, 0, %s28
      %s31 = sadd.s32 1, %s22
      %s32 = scalar_select %p29, %s31, %s22
      %p33 = scmp.ge.s32.totalorder %s32, 2
      %s34 = scalar_select %p33, 0, %s32
      %s35 = ssub.s32 %s22, %s34
      %s36 = ssub.s32 %s23, %s30
      %s37 = sor.u32 %s35, %s36
      %p38 = scmp.eq.s32.totalorder %s37, 0
      %s40 = sadd.s32 %s39, 1
      %s41 = scalar_select %p38, %s39, %s40
      %p44 = pneg %p38
      %p45 = scmp.eq.s32.totalorder %s15, 1
      %p46 = por %p44, %p45
      %p47 = scmp.ne.s32.totalorder %s39, %s42
      %p48 = scmp.eq.s32.totalorder %s15, 0
      %p49 = por %p47, %p48
      %p50 = scmp.ne.s32.totalorder %s39, %s42
      %p51 = scmp.eq.s32.totalorder %s20, 1
      %p52 = por %p50, %p51
      %p53 = scmp.ne.s32.totalorder %s42, %s43
      %p54 = scmp.eq.s32.totalorder %s20, 0
      %p55 = por %p53, %p54
      %p56 = scmp.ne.s32.totalorder %s42, %s43
      %p57 = scmp.eq.s32.totalorder %s21, 1
      %p58 = por %p56, %p57
      %p60 = scmp.ne.s32.totalorder %s43, %s59
      %p61 = scmp.eq.s32.totalorder %s21, 0
      %p62 = por %p60, %p61
      %s64 = sadd.s32 %s63, 1
      %p67 = scmp.eq.s32.totalorder %s15, 1
      %p68 = scmp.ne.s32.totalorder %s63, %s65
      %p69 = scmp.eq.s32.totalorder %s15, 0
      %p70 = por %p68, %p69
      %p71 = scmp.ne.s32.totalorder %s63, %s65
      %p72 = scmp.eq.s32.totalorder %s20, 1
      %p73 = por %p71, %p72
      %p74 = scmp.ne.s32.totalorder %s65, %s66
      %p75 = scmp.eq.s32.totalorder %s20, 0
      %p76 = por %p74, %p75
      %p77 = scmp.ne.s32.totalorder %s65, %s66
      %p78 = scmp.eq.s32.totalorder %s21, 1
      %p79 = por %p77, %p78
      %p81 = scmp.ne.s32.totalorder %s66, %s80
      %p82 = scmp.eq.s32.totalorder %s21, 0
      %p83 = por %p81, %p82
      %s85 = sadd.s32 %s84, 1
      %p88 = scmp.eq.s32.totalorder %s15, 1
      %p89 = scmp.ne.s32.totalorder %s84, %s86
      %p90 = scmp.eq.s32.totalorder %s15, 0
      %p91 = por %p89, %p90
      %p92 = scmp.ne.s32.totalorder %s84, %s86
      %p93 = scmp.eq.s32.totalorder %s20, 1
      %p94 = por %p92, %p93
      %p95 = scmp.ne.s32.totalorder %s86, %s87
      %p96 = scmp.eq.s32.totalorder %s20, 0
      %p97 = por %p95, %p96
      %p98 = scmp.ne.s32.totalorder %s86, %s87
      %p99 = scmp.eq.s32.totalorder %s21, 1
      %p100 = por %p98, %p99
      %p102 = scmp.ne.s32.totalorder %s87, %s101
      %p103 = scmp.eq.s32.totalorder %s21, 0
      %p104 = por %p102, %p103
      %s105 = ssub.s32 %s22, %s34
      %s106 = ssub.s32 %s23, %s30
      %s107 = sor.u32 %s105, %s106
      %p108 = scmp.eq.s32.totalorder %s107, 0
      %s110 = sadd.s32 %s109, 1
      %s111 = scalar_select %p108, %s109, %s110
      %p114 = pneg %p108
      %p115 = scmp.eq.s32.totalorder %s15, 1
      %p116 = por %p114, %p115
      %p117 = scmp.ne.s32.totalorder %s109, %s112
      %p118 = scmp.eq.s32.totalorder %s15, 0
      %p119 = por %p117, %p118
      %p120 = scmp.ne.s32.totalorder %s109, %s112
      %p121 = scmp.eq.s32.totalorder %s20, 1
      %p122 = por %p120, %p121
      %p123 = scmp.ne.s32.totalorder %s112, %s113
      %p124 = scmp.eq.s32.totalorder %s20, 0
      %p125 = por %p123, %p124
      %p126 = scmp.ne.s32.totalorder %s112, %s113
      %p127 = scmp.eq.s32.totalorder %s21, 1
      %p128 = por %p126, %p127
      %p130 = scmp.ne.s32.totalorder %s113, %s129
      %p131 = scmp.eq.s32.totalorder %s21, 0
      %p132 = por %p130, %p131
      %p133 = scmp.le.s32.totalorder 1, %s15
      %p134 = scmp.lt.s32.totalorder %s15, 3
      %p135 = pnand %p133, %p134
      %p136 = pneg %p135
      // Predicated region
      $region9: #{tpu_custom_call.1} parent=5 // pred_check
        _
      $region10: #{tpu_custom_call.1} parent=5 // pred_check_branch
        %138 = sbr.rel (%p135) target = $region12
      $region11: #{tpu_custom_call.1} parent=5 // pred_region
        %s139 = ssub.s32 %s15, 1
        // Predicated region
        $region13: #{tpu_custom_call.1} parent=11 // pred_check
          %p140 = pneg %p76
        $region14: #{tpu_custom_call.1} parent=11 // pred_check_branch
          %142 = sbr.rel (%p140) target = $region16
        $region15: #{tpu_custom_call.1} parent=11 // pred_region
          _
        $region16: #{tpu_custom_call.1} parent=11 // pred_fallthru
          _
        // Predicated region
        $region17: #{tpu_custom_call.1} parent=11 // pred_check
          %p143 = pneg %p97
        $region18: #{tpu_custom_call.1} parent=11 // pred_check_branch
          %145 = sbr.rel (%p143) target = $region20
        $region19: #{tpu_custom_call.1} parent=11 // pred_region
          _
        $region20: #{tpu_custom_call.1} parent=11 // pred_fallthru
          _
      $region12: #{tpu_custom_call.1} parent=5 // pred_fallthru
        _
      %p146 = scmp.lt.s32.totalorder %s15, 2
      // Predicated region
      $region21: #{tpu_custom_call.1} parent=5 // pred_check
        %p147 = pneg %p146
      $region22: #{tpu_custom_call.1} parent=5 // pred_check_branch
        %149 = sbr.rel (%p147) target = $region24
      $region23: #{tpu_custom_call.1} parent=5 // pred_region
        // Predicated region
        $region25: #{tpu_custom_call.1} parent=23 // pred_check
          %p150 = pneg %p49
        $region26: #{tpu_custom_call.1} parent=23 // pred_check_branch
          %152 = sbr.rel (%p150) target = $region28
        $region27: #{tpu_custom_call.1} parent=23 // pred_region
          %s153 = sand.u32 %s39, 1
          %s154 = scalar_lea.sflag [#allocation3], %s153
          %s155 = sand.u32 %s39, 1
          %s156 = smul.addr %s155, 64
          %s157 = scalar_lea.vmem [#allocation2], %s156
          %s158 = smul.u32 2, %s23
          %s160 = ssub.s32 1024, 1024
          %161 = vsyncadd %s154, %s160
          %s162 = smul.addr %s22, 8
          %s163 = sadd.s32 %s158, %s162
          %s164 = smul.addr %s163, 128
          %s165 = scalar_lea.hbm %s0, %s164
          %s166 = sshll.u32 %s157, 4
          %s167 = int_to_ptr.vmem [resolvable:$true] %s166
          %172 = dma.hbm_to_vmem [thread:$0]  %s165, 1024, %s167, %s154, 256, 256, 16
        $region28: #{tpu_custom_call.1} parent=23 // pred_fallthru
          _
      $region24: #{tpu_custom_call.1} parent=5 // pred_fallthru
        _
      %p173 = scmp.le.s32.totalorder 1, %s15
      %p174 = scmp.lt.s32.totalorder %s15, 3
      %p175 = pnand %p173, %p174
      %p176 = pneg %p175
      // Predicated region
      $region29: #{tpu_custom_call.1} parent=5 // pred_check
        _
      $region30: #{tpu_custom_call.1} parent=5 // pred_check_branch
        %178 = sbr.rel (%p175) target = $region32
      $region31: #{tpu_custom_call.1} parent=5 // pred_region
        %s179 = ssub.s32 %s15, 1
        %s180 = sand.u32 %s42, 1
        %s181 = scalar_lea.sflag [#allocation3], %s180
        %s182 = sand.u32 %s42, 1
        %s183 = smul.addr %s182, 64
        %s184 = scalar_lea.vmem [#allocation2], %s183
        // Predicated region
        $region33: #{tpu_custom_call.1} parent=31 // pred_check
          %p185 = pneg %p55
        $region34: #{tpu_custom_call.1} parent=31 // pred_check_branch
          %187 = sbr.rel (%p185) target = $region36
        $region35: #{tpu_custom_call.1} parent=31 // pred_region
          %188 = dma.done %s181, 1024
        $region36: #{tpu_custom_call.1} parent=31 // pred_fallthru
          _
        %s189 = sand.u32 %s42, 1
        %s190 = scalar_lea.sflag [#allocation3], %s189
        %s191 = sand.u32 %s42, 1
        %s192 = smul.addr %s191, 64
        %s193 = scalar_lea.vmem [#allocation2], %s192
        %p194 = pneg %p55
        %p195 = pneg %p52
        %p196 = pneg %p76
        %p197 = pneg %p73
        %p198 = pneg %p97
        %p199 = pneg %p94
        %p200 = pneg %p125
        %p201 = pneg %p122
        %s202 = sand.u32 %s112, 1
        %s203 = scalar_lea.sflag [#allocation4], %s202
        %s204 = sand.u32 %s112, 1
        %s205 = smul.addr %s204, 64
        %s206 = scalar_lea.vmem [#allocation5], %s205
        %s207 = smul.u32 2, %s25
        %s208 = smul.u32 2, %s25
        %v209 = vld [vmem:[%s184] sm:$0xff]
        %v210 = vld [vmem:[%s184 + $0x8] sm:$0xff]
        %v211 = vld [vmem:[%s184 + $0x10] sm:$0xff]
        %v212 = vld [vmem:[%s184 + $0x18] sm:$0xff]
        %v213 = vld [vmem:[%s184 + $0x20] sm:$0xff]
        %v214 = vld [vmem:[%s184 + $0x28] sm:$0xff]
        %v215 = vld [vmem:[%s184 + $0x30] sm:$0xff]
        %v216 = vld [vmem:[%s184 + $0x38] sm:$0xff]
        %v217 = vld [vmem:[%s1] sm:$0xff]
        %v218 = vld [vmem:[%s1 + $0x8] sm:$0xff]
        %v219 = vld [vmem:[%s1 + $0x10] sm:$0xff]
        %v220 = vld [vmem:[%s1 + $0x18] sm:$0xff]
        %v221 = vld [vmem:[%s2] sm:$0xff]
        %v222 = vld [vmem:[%s2 + $0x8] sm:$0xff]
        %v223 = vld [vmem:[%s2 + $0x10] sm:$0xff]
        %v224 = vld [vmem:[%s2 + $0x18] sm:$0xff]
        %226 = vset.pattern.permute.xlu0 0
        %227 = vperm.xlu0 %226, %v221
        %v228 = vpop.permute.xlu0 %227
        %231 = vset.pattern.permute.xlu0 0
        %232 = vperm.xlu0 %231, %v222
        %v233 = vpop.permute.xlu0 %232
        %236 = vset.pattern.permute.xlu0 0
        %237 = vperm.xlu0 %236, %v223
        %v238 = vpop.permute.xlu0 %237
        %241 = vset.pattern.permute.xlu0 0
        %242 = vperm.xlu0 %241, %v224
        %v243 = vpop.permute.xlu0 %242
        %vm245 = vcmask 261120
        %v247 = vsel %vm245, %v217, 0
        %v250 = vsel %vm245, %v218, 0
        %v253 = vsel %vm245, %v219, 0
        %v256 = vsel %vm245, %v220, 0
        %258 = vmatprep.subr.mxu0 %v210
        %259 = vmatpush1.msra.mxu0 %v209
        %260 = vmatprep.subr.mxu0 %v212
        %261 = vmatpush1.msra.mxu0 %v211
        %262 = vmatprep.subr.mxu0 %v214
        %263 = vmatpush1.msra.mxu0 %v213
        %264 = vmatprep.subr.mxu0 %v216
        %265 = vmatpush1.msra.mxu0 %v215
        %266 = vmatprep.subr.mxu0 0.0
        %267 = vmatpush1.msra.mxu0 0.0
        %268 = vmatprep.subr.mxu0 0.0
        %269 = vmatpush1.msra.mxu0 0.0
        %270 = vmatprep.subr.mxu0 0.0
        %271 = vmatpush1.msra.mxu0 0.0
        %272 = vmatprep.subr.mxu0 0.0
        %273 = vmatpush1.msra.mxu0 0.0
        %274 = vmatprep.subr.mxu0 0.0
        %275 = vmatpush1.msra.mxu0 0.0
        %276 = vmatprep.subr.mxu0 0.0
        %277 = vmatpush1.msra.mxu0 0.0
        %278 = vmatprep.subr.mxu0 0.0
        %279 = vmatpush1.msra.mxu0 0.0
        %280 = vmatprep.subr.mxu0 0.0
        %281 = vmatpush1.msra.mxu0 0.0
        %282 = vmatprep.subr.mxu0 0.0
        %283 = vmatpush1.msra.mxu0 0.0
        %284 = vmatprep.subr.mxu0 0.0
        %285 = vmatpush1.msra.mxu0 0.0
        %286 = vmatprep.subr.mxu0 0.0
        %287 = vmatpush1.msra.mxu0 0.0
        %288 = vmatprep.subr.mxu0 0.0
        %289 = vmatpush1.msra.mxu0 0.0
        %290 = vmatprep.subr.mxu0 0.0
        %291 = vmatpush1.msra.mxu0 0.0
        %292 = vmatprep.subr.mxu0 0.0
        %293 = vmatpush1.msra.mxu0 0.0
        %294 = vmatprep.subr.mxu0 0.0
        %295 = vmatpush1.msra.mxu0 0.0
        %296 = vmatprep.subr.mxu0 0.0
        %297 = vmatpush1.msra.mxu0 0.0
        %298 = vmatprep.subr.mxu0 0.0
        %299 = vmatpush1.msra.mxu0 0.0
        %300 = vmatprep.subr.mxu0 0.0
        %301 = vmatpush1.msra.mxu0 0.0
        %302 = vmatprep.subr.mxu0 0.0
        %303 = vmatpush1.msra.mxu0 0.0
        %304 = vmatprep.subr.mxu0 0.0
        %305 = vmatpush1.msra.mxu0 0.0
        %306 = vmatprep.subr.mxu0 0.0
        %307 = vmatpush1.msra.mxu0 0.0
        %308 = vmatprep.subr.mxu0 0.0
        %309 = vmatpush1.msra.mxu0 0.0
        %310 = vmatprep.subr.mxu0 0.0
        %311 = vmatpush1.msra.mxu0 0.0
        %312 = vmatprep.subr.mxu0 0.0
        %313 = vmatpush1.msra.mxu0 0.0
        %314 = vmatprep.subr.mxu0 0.0
        %315 = vmatpush1.msra.mxu0 0.0
        %316 = vmatprep.subr.mxu0 0.0
        %317 = vmatpush1.msra.mxu0 0.0
        %318 = vmatprep.subr.mxu0 0.0
        %319 = vmatpush1.msra.mxu0 0.0
        %320 = vmatprep.subr.mxu0 0.0
        %321 = vmatpush1.msra.mxu0 0.0
        %322 = vmatprep.mubr.f32.mxu0 0.0
        %323 = vmatmul.mubr.f32.gmra.mrb[0].mxu0 %v247
        %v324 = vpop.f32.mrb[0].mxu0
        %v325 = vadd.f32 %v228, %v324
        %v326 = vpop.f32.mrb[0].mxu0
        %v327 = vadd.f32 %v228, %v326
        %328 = vmatprep.mubr.f32.mxu0 0.0
        %329 = vmatmul.mubr.f32.gmra.mrb[0].mxu0 %v250
        %v330 = vpop.f32.mrb[0].mxu0
        %v331 = vadd.f32 %v233, %v330
        %v332 = vpop.f32.mrb[0].mxu0
        %v333 = vadd.f32 %v233, %v332
        %334 = vmatprep.mubr.f32.mxu0 0.0
        %335 = vmatmul.mubr.f32.gmra.mrb[0].mxu0 %v253
        %v336 = vpop.f32.mrb[0].mxu0
        %v337 = vadd.f32 %v238, %v336
        %v338 = vpop.f32.mrb[0].mxu0
        %v339 = vadd.f32 %v238, %v338
        %340 = vmatprep.mubr.f32.mxu0 0.0
        %341 = vmatmul.mubr.f32.gmra.mrb[0].mxu0 %v256
        %v342 = vpop.f32.mrb[0].mxu0
        %v343 = vadd.f32 %v243, %v342
        %v344 = vpop.f32.mrb[0].mxu0
        %v345 = vadd.f32 %v243, %v344
        %346 = vdwg.mxu0
        %v347 = vadd.f32 %v325, %v209
        %v348 = vadd.f32 %v327, %v210
        %v349 = vadd.f32 %v331, %v211
        %v350 = vadd.f32 %v333, %v212
        %v351 = vadd.f32 %v337, %v213
        %v352 = vadd.f32 %v339, %v214
        %v353 = vadd.f32 %v343, %v215
        %v354 = vadd.f32 %v345, %v216
        %355 = vst [vmem:[%s206] sm:$0xff] %v347
        %356 = vst [vmem:[%s206 + $0x8] sm:$0xff] %v348
        %357 = vst [vmem:[%s206 + $0x10] sm:$0xff] %v349
        %358 = vst [vmem:[%s206 + $0x18] sm:$0xff] %v350
        %359 = vst [vmem:[%s206 + $0x20] sm:$0xff] %v351
        %360 = vst [vmem:[%s206 + $0x28] sm:$0xff] %v352
        %361 = vst [vmem:[%s206 + $0x30] sm:$0xff] %v353
        %362 = vst [vmem:[%s206 + $0x38] sm:$0xff] %v354
        %s363 = sand.u32 %s112, 1
        %s364 = scalar_lea.sflag [#allocation4], %s363
        %s365 = sand.u32 %s112, 1
        %s366 = smul.addr %s365, 64
        %s367 = scalar_lea.vmem [#allocation5], %s366
        // Predicated region
        $region37: #{tpu_custom_call.1} parent=31 // pred_check
          %p368 = pneg %p122
        $region38: #{tpu_custom_call.1} parent=31 // pred_check_branch
          %370 = sbr.rel (%p368) target = $region40
        $region39: #{tpu_custom_call.1} parent=31 // pred_region
          %s371 = smul.u32 2, %s25
          %s373 = ssub.s32 1024, 1024
          %374 = vsyncadd %s364, %s373
          %s375 = smul.addr %s24, 8
          %s376 = sadd.s32 %s371, %s375
          %s377 = smul.addr %s376, 128
          %s378 = scalar_lea.hbm %s3, %s377
          %s379 = sshll.u32 %s367, 4
          %s380 = int_to_ptr.vmem [resolvable:$true] %s379
          %385 = dma.vmem_to_hbm [thread:$0]  %s380, 1024, %s378, %s364, 256, 256, 16
        $region40: #{tpu_custom_call.1} parent=31 // pred_fallthru
          _
      $region32: #{tpu_custom_call.1} parent=5 // pred_fallthru
        _
      %p386 = scmp.le.s32.totalorder 2, %s15
      // Predicated region
      $region41: #{tpu_custom_call.1} parent=5 // pred_check
        %p387 = pneg %p386
      $region42: #{tpu_custom_call.1} parent=5 // pred_check_branch
        %389 = sbr.rel (%p387) target = $region44
      $region43: #{tpu_custom_call.1} parent=5 // pred_region
        %s390 = ssub.s32 %s15, 2
        // Predicated region
        $region45: #{tpu_custom_call.1} parent=43 // pred_check
          %p391 = pneg %p128
        $region46: #{tpu_custom_call.1} parent=43 // pred_check_branch
          %393 = sbr.rel (%p391) target = $region48
        $region47: #{tpu_custom_call.1} parent=43 // pred_region
          %s394 = sand.u32 %s113, 1
          %s395 = scalar_lea.sflag [#allocation4], %s394
          %s396 = sand.u32 %s113, 1
          %s397 = smul.addr %s396, 64
          %s398 = scalar_lea.vmem [#allocation5], %s397
          %399 = dma.done %s395, 1024
        $region48: #{tpu_custom_call.1} parent=43 // pred_fallthru
          _
      $region44: #{tpu_custom_call.1} parent=5 // pred_fallthru
        _
    $region6: #{tpu_custom_call.1} parent=1 // loop_footer
      %s19 = sadd.s32 1, %s15
    $region7: #{tpu_custom_call.1} parent=1 // loop_footer_branch
      %14 = sbr.rel target = $region3
    $region8: #{tpu_custom_call.1} parent=1 // loop_exit
      _
    %400 = vsyncpa [#allocation3], 1
    %s401 = scalar_lea.sflag [#allocation3], 1
    %402 = vsyncpa %s401, 1
    %403 = vsyncpa [#allocation4], 1
    %s404 = scalar_lea.sflag [#allocation4], 1
    %405 = vsyncpa %s404, 1

</llo_original>
